<compile_context>
chip_gen: v6e
topology: v6e:2x2x1
jax: 0.10.0
libtpu: 0.0.40
codegen_flags: <defaults>
</compile_context>

<pallas_src>
import jax
import jax.numpy as jnp
from jax import lax
from jax.experimental import pallas as pl
from jax.experimental.pallas import tpu as pltpu

KH = KW = 3  # kernel_size = 3


def _round_up(x, m):
    return (x + m - 1) // m * m


def conv2d_pallas(x_nchw, w_oihw, b, *, input_dtype=None):
    """Valid conv, stride 1. x:(N,Cin,H,W), w:(Cout,Cin,KH,KW), b:(Cout,). f32 accumulate."""
    N, Cin, H, W = x_nchw.shape
    Cout = w_oihw.shape[0]
    Ho, Wo = H - KH + 1, W - KW + 1
    HW = H * W

    # Lane-dense per-image output slab: one column per input pixel (h*W + w).
    MOUT = _round_up(HW, 128)
    halo = (KH - 1) * W + (KW - 1)           # largest static tap shift
    HWP = _round_up(MOUT + halo, 128)        # padded flattened-image lane width
    COUT_P = _round_up(Cout, 8)              # sublane-aligned output channels
    K = KH * KW * Cin

    # Flatten spatial dims; zero-pad lanes so every tap slice stays in-bounds.
    x_flat = x_nchw.reshape(N, Cin, HW)
    x_pad = jnp.pad(x_flat, ((0, 0), (0, 0), (0, HWP - HW)))

    # Fold weights to (Cout, KH*KW*Cin) with (kh, kw)-major / ci-minor columns
    # (matching the tap slices below); zero-pad Cout to a full sublane group.
    w2 = jnp.transpose(w_oihw, (0, 2, 3, 1)).reshape(Cout, K)
    w2 = jnp.pad(w2, ((0, COUT_P - Cout), (0, 0)))
    b2 = jnp.pad(b.reshape(Cout, 1), ((0, COUT_P - Cout), (0, 0))).astype(jnp.float32)

    if input_dtype is not None:              # e.g. bf16 stream, f32 accumulate
        x_pad = x_pad.astype(input_dtype)
        w2 = w2.astype(input_dtype)

    def kernel(x_ref, w_ref, b_ref, o_ref):
        # x_ref: (1, Cin, HWP)     one flattened, lane-padded image
        # w_ref: (COUT_P, K)       folded weights (resident across the grid)
        # b_ref: (COUT_P, 1)       bias column
        # o_ref: (1, COUT_P, MOUT) lane-dense output slab for this image
        x = x_ref[0]                         # (Cin, HWP)
        w = w_ref[...]                       # (COUT_P, K)
        acc = jnp.zeros((COUT_P, MOUT), jnp.float32)
        for kh in range(KH):                 # fused im2col: 9 statically
            for kw in range(KW):             # lane-shifted taps, accumulated on MXU
                j = kh * KW + kw
                off = kh * W + kw
                xs = x[:, off:off + MOUT]            # (Cin, MOUT)
                wj = w[:, j * Cin:(j + 1) * Cin]     # (COUT_P, Cin)
                acc = acc + jnp.dot(wj, xs, preferred_element_type=jnp.float32)
        o_ref[0] = (acc + b_ref[...]).astype(o_ref.dtype)

    out = pl.pallas_call(
        kernel,
        out_shape=jax.ShapeDtypeStruct((N, COUT_P, MOUT), jnp.float32),
        grid=(N,),
        in_specs=[
            pl.BlockSpec((1, Cin, HWP), lambda n: (n, 0, 0)),   # one image / step
            pl.BlockSpec((COUT_P, K), lambda n: (0, 0)),        # weights resident
            pl.BlockSpec((COUT_P, 1), lambda n: (0, 0)),        # bias resident
        ],
        out_specs=pl.BlockSpec((1, COUT_P, MOUT), lambda n: (n, 0, 0)),
        compiler_params=pltpu.CompilerParams(
            dimension_semantics=("parallel",),        # pipeline + megacore shard
            vmem_limit_bytes=32 * 1024 * 1024,        # sized for v7x scoped VMEM
        ),
    )(x_pad, w2, b2)

    # Drop channel padding and junk columns, recover NCHW valid window.
    out = out[:, :Cout, :HW].reshape(N, Cout, H, W)
    return out[:, :, :Ho, :Wo]


if __name__ == "__main__":
    key = jax.random.PRNGKey(0)
    kx, kw_, kb = jax.random.split(key, 3)

    # Small shapes consistent with the module: batch=2, Cin=3, spatial=16.
    N, Cin, H, W = 2, 3, 16, 16
    Cout = 6

    x = jax.random.normal(kx, (N, Cin, H, W), dtype=jnp.float32)

    # Deterministic param init (PyTorch-default-style uniform bound = 1/sqrt(fan_in)).
    fan_in = Cin * KH * KW
    bound = 1.0 / (fan_in ** 0.5)
    w = jax.random.uniform(kw_, (Cout, Cin, KH, KW), jnp.float32, -bound, bound)
    b = jax.random.uniform(kb, (Cout,), jnp.float32, -bound, bound)

    # Reference: XLA conv with the same NCHW/OIHW semantics as torch Conv2d.
    ref = lax.conv_general_dilated(
        x, w, window_strides=(1, 1), padding="VALID",
        dimension_numbers=("NCHW", "OIHW", "NCHW"),
    ) + b[None, :, None, None]

    out = jax.block_until_ready(conv2d_pallas(x, w, b))
    assert out.shape == (N, Cout, H - 2, W - 2)
    assert jnp.allclose(out, ref, atol=1e-5, rtol=1e-5)

    # bf16 input/weight stream (halves the dominant HBM read), f32 accumulate.
    out_bf16 = jax.block_until_ready(conv2d_pallas(x, w, b, input_dtype=jnp.bfloat16))
    assert jnp.allclose(out_bf16, ref, atol=3e-2, rtol=3e-2)

    print("KERNEL_OK")
</pallas_src>

<mosaic_0001>
module attributes {stable_mosaic.version = 11 : i64} {
  func.func @kernel(%arg0: i32, %arg1: memref<1x3x384xf32, #tpu.memory_space<vmem>>, %arg2: memref<8x27xf32, #tpu.memory_space<vmem>>, %arg3: memref<8x1xf32, #tpu.memory_space<vmem>>, %arg4: memref<1x8x256xf32, #tpu.memory_space<vmem>>) attributes {dimension_semantics = [#tpu.dimension_semantics<parallel>], iteration_bounds = array<i64: 2>, scalar_prefetch = 0 : i64, scratch_operands = 0 : i64, tpu.core_type = #tpu.core_type<tc>, window_params = [{transform_indices = @transform_0, window_bounds = array<i64: 1, 3, 384>}, {pipeline_mode = #tpu.pipeline_mode<synchronous>, transform_indices = @transform_1, window_bounds = array<i64: 8, 27>}, {pipeline_mode = #tpu.pipeline_mode<synchronous>, transform_indices = @transform_2, window_bounds = array<i64: 8, 1>}, {transform_indices = @transform_3, window_bounds = array<i64: 1, 8, 256>}]} {
    %c0 = arith.constant 0 : index
    %c0_0 = arith.constant 0 : index
    %c0_1 = arith.constant 0 : index
    %0 = vector.load %arg1[%c0, %c0_0, %c0_1] : memref<1x3x384xf32, #tpu.memory_space<vmem>>, vector<1x3x384xf32>
    %1 = vector.shape_cast %0 : vector<1x3x384xf32> to vector<3x384xf32>
    %c0_2 = arith.constant 0 : index
    %c0_3 = arith.constant 0 : index
    %2 = vector.load %arg2[%c0_2, %c0_3] : memref<8x27xf32, #tpu.memory_space<vmem>>, vector<8x27xf32>
    %cst = arith.constant 0.000000e+00 : f32
    %3 = vector.broadcast %cst : f32 to vector<8x256xf32>
    %4 = vector.extract_strided_slice %1 {offsets = [0, 0], sizes = [3, 256], strides = [1, 1]} : vector<3x384xf32> to vector<3x256xf32>
    %5 = vector.extract_strided_slice %2 {offsets = [0, 0], sizes = [8, 3], strides = [1, 1]} : vector<8x27xf32> to vector<8x3xf32>
    %cst_4 = arith.constant dense<0.000000e+00> : vector<8x256xf32>
    %6 = tpu.matmul %5, %4, %cst_4 {dimension_numbers = #tpu.dot_dimension_numbers<[1], [0], [0], [1], [0, 0, 1, 1], [], []>} : vector<8x3xf32>, vector<3x256xf32>, vector<8x256xf32> -> vector<8x256xf32>
    %7 = arith.addf %3, %6 : vector<8x256xf32>
    %8 = vector.extract_strided_slice %1 {offsets = [0, 1], sizes = [3, 256], strides = [1, 1]} : vector<3x384xf32> to vector<3x256xf32>
    %9 = vector.extract_strided_slice %2 {offsets = [0, 3], sizes = [8, 3], strides = [1, 1]} : vector<8x27xf32> to vector<8x3xf32>
    %cst_5 = arith.constant dense<0.000000e+00> : vector<8x256xf32>
    %10 = tpu.matmul %9, %8, %cst_5 {dimension_numbers = #tpu.dot_dimension_numbers<[1], [0], [0], [1], [0, 0, 1, 1], [], []>} : vector<8x3xf32>, vector<3x256xf32>, vector<8x256xf32> -> vector<8x256xf32>
    %11 = arith.addf %7, %10 : vector<8x256xf32>
    %12 = vector.extract_strided_slice %1 {offsets = [0, 2], sizes = [3, 256], strides = [1, 1]} : vector<3x384xf32> to vector<3x256xf32>
    %13 = vector.extract_strided_slice %2 {offsets = [0, 6], sizes = [8, 3], strides = [1, 1]} : vector<8x27xf32> to vector<8x3xf32>
    %cst_6 = arith.constant dense<0.000000e+00> : vector<8x256xf32>
    %14 = tpu.matmul %13, %12, %cst_6 {dimension_numbers = #tpu.dot_dimension_numbers<[1], [0], [0], [1], [0, 0, 1, 1], [], []>} : vector<8x3xf32>, vector<3x256xf32>, vector<8x256xf32> -> vector<8x256xf32>
    %15 = arith.addf %11, %14 : vector<8x256xf32>
    %16 = vector.extract_strided_slice %1 {offsets = [0, 16], sizes = [3, 256], strides = [1, 1]} : vector<3x384xf32> to vector<3x256xf32>
    %17 = vector.extract_strided_slice %2 {offsets = [0, 9], sizes = [8, 3], strides = [1, 1]} : vector<8x27xf32> to vector<8x3xf32>
    %cst_7 = arith.constant dense<0.000000e+00> : vector<8x256xf32>
    %18 = tpu.matmul %17, %16, %cst_7 {dimension_numbers = #tpu.dot_dimension_numbers<[1], [0], [0], [1], [0, 0, 1, 1], [], []>} : vector<8x3xf32>, vector<3x256xf32>, vector<8x256xf32> -> vector<8x256xf32>
    %19 = arith.addf %15, %18 : vector<8x256xf32>
    %20 = vector.extract_strided_slice %1 {offsets = [0, 17], sizes = [3, 256], strides = [1, 1]} : vector<3x384xf32> to vector<3x256xf32>
    %21 = vector.extract_strided_slice %2 {offsets = [0, 12], sizes = [8, 3], strides = [1, 1]} : vector<8x27xf32> to vector<8x3xf32>
    %cst_8 = arith.constant dense<0.000000e+00> : vector<8x256xf32>
    %22 = tpu.matmul %21, %20, %cst_8 {dimension_numbers = #tpu.dot_dimension_numbers<[1], [0], [0], [1], [0, 0, 1, 1], [], []>} : vector<8x3xf32>, vector<3x256xf32>, vector<8x256xf32> -> vector<8x256xf32>
    %23 = arith.addf %19, %22 : vector<8x256xf32>
    %24 = vector.extract_strided_slice %1 {offsets = [0, 18], sizes = [3, 256], strides = [1, 1]} : vector<3x384xf32> to vector<3x256xf32>
    %25 = vector.extract_strided_slice %2 {offsets = [0, 15], sizes = [8, 3], strides = [1, 1]} : vector<8x27xf32> to vector<8x3xf32>
    %cst_9 = arith.constant dense<0.000000e+00> : vector<8x256xf32>
    %26 = tpu.matmul %25, %24, %cst_9 {dimension_numbers = #tpu.dot_dimension_numbers<[1], [0], [0], [1], [0, 0, 1, 1], [], []>} : vector<8x3xf32>, vector<3x256xf32>, vector<8x256xf32> -> vector<8x256xf32>
    %27 = arith.addf %23, %26 : vector<8x256xf32>
    %28 = vector.extract_strided_slice %1 {offsets = [0, 32], sizes = [3, 256], strides = [1, 1]} : vector<3x384xf32> to vector<3x256xf32>
    %29 = vector.extract_strided_slice %2 {offsets = [0, 18], sizes = [8, 3], strides = [1, 1]} : vector<8x27xf32> to vector<8x3xf32>
    %cst_10 = arith.constant dense<0.000000e+00> : vector<8x256xf32>
    %30 = tpu.matmul %29, %28, %cst_10 {dimension_numbers = #tpu.dot_dimension_numbers<[1], [0], [0], [1], [0, 0, 1, 1], [], []>} : vector<8x3xf32>, vector<3x256xf32>, vector<8x256xf32> -> vector<8x256xf32>
    %31 = arith.addf %27, %30 : vector<8x256xf32>
    %32 = vector.extract_strided_slice %1 {offsets = [0, 33], sizes = [3, 256], strides = [1, 1]} : vector<3x384xf32> to vector<3x256xf32>
    %33 = vector.extract_strided_slice %2 {offsets = [0, 21], sizes = [8, 3], strides = [1, 1]} : vector<8x27xf32> to vector<8x3xf32>
    %cst_11 = arith.constant dense<0.000000e+00> : vector<8x256xf32>
    %34 = tpu.matmul %33, %32, %cst_11 {dimension_numbers = #tpu.dot_dimension_numbers<[1], [0], [0], [1], [0, 0, 1, 1], [], []>} : vector<8x3xf32>, vector<3x256xf32>, vector<8x256xf32> -> vector<8x256xf32>
    %35 = arith.addf %31, %34 : vector<8x256xf32>
    %36 = vector.extract_strided_slice %1 {offsets = [0, 34], sizes = [3, 256], strides = [1, 1]} : vector<3x384xf32> to vector<3x256xf32>
    %37 = vector.extract_strided_slice %2 {offsets = [0, 24], sizes = [8, 3], strides = [1, 1]} : vector<8x27xf32> to vector<8x3xf32>
    %cst_12 = arith.constant dense<0.000000e+00> : vector<8x256xf32>
    %38 = tpu.matmul %37, %36, %cst_12 {dimension_numbers = #tpu.dot_dimension_numbers<[1], [0], [0], [1], [0, 0, 1, 1], [], []>} : vector<8x3xf32>, vector<3x256xf32>, vector<8x256xf32> -> vector<8x256xf32>
    %39 = arith.addf %35, %38 : vector<8x256xf32>
    %c0_13 = arith.constant 0 : index
    %c0_14 = arith.constant 0 : index
    %40 = vector.load %arg3[%c0_13, %c0_14] : memref<8x1xf32, #tpu.memory_space<vmem>>, vector<8x1xf32>
    %41 = vector.broadcast %40 : vector<8x1xf32> to vector<8x256xf32>
    %42 = arith.addf %39, %41 : vector<8x256xf32>
    %c0_15 = arith.constant 0 : index
    %c0_16 = arith.constant 0 : index
    %c0_17 = arith.constant 0 : index
    %43 = vector.load %arg4[%c0_15, %c0_16, %c0_17] : memref<1x8x256xf32, #tpu.memory_space<vmem>>, vector<1x8x256xf32>
    %44 = vector.shape_cast %43 : vector<1x8x256xf32> to vector<8x256xf32>
    %45 = vector.shape_cast %42 : vector<8x256xf32> to vector<1x8x256xf32>
    tpu.vector_store %arg4[%c0_15, %c0_16, %c0_17], %45 {strides = array<i32>} : memref<1x8x256xf32, #tpu.memory_space<vmem>>, vector<1x8x256xf32>,
    return
  }
  func.func @transform_0(%arg0: i32) -> (i32, i32, i32) {
    %c0_i32 = arith.constant 0 : i32
    %c0_i32_0 = arith.constant 0 : i32
    %c0_i32_1 = arith.constant 0 : i32
    return %arg0, %c0_i32, %c0_i32_0 : i32, i32, i32
  }
  func.func @transform_1(%arg0: i32) -> (i32, i32) {
    %c0_i32 = arith.constant 0 : i32
    %c0_i32_0 = arith.constant 0 : i32
    %c0_i32_1 = arith.constant 0 : i32
    return %c0_i32, %c0_i32_0 : i32, i32
  }
  func.func @transform_2(%arg0: i32) -> (i32, i32) {
    %c0_i32 = arith.constant 0 : i32
    %c0_i32_0 = arith.constant 0 : i32
    %c0_i32_1 = arith.constant 0 : i32
    return %c0_i32, %c0_i32_0 : i32, i32
  }
  func.func @transform_3(%arg0: i32) -> (i32, i32, i32) {
    %c0_i32 = arith.constant 0 : i32
    %c0_i32_0 = arith.constant 0 : i32
    %c0_i32_1 = arith.constant 0 : i32
    return %arg0, %c0_i32, %c0_i32_0 : i32, i32, i32
  }
}

</mosaic_0001>

<llo_original>
// kernel: tpu_custom_call.1
$region0: #{tpu_custom_call.1}
  #allocation0 [shape = 'u32[]', space=smem, size = 0x4, offset = 0x4, fixed_abs, tag = 'smem constant byte address 0x4 - core index']
  #allocation1 [shape = 'u32[144,128]{1,0:T(1,128)}', space=vmem, size = 0x12000, scoped, tag = 'internal scratch']
  %s0 = inlined_call_operand.vmem [shape: f32[2,3,384], index: 0, kind: input, shape index: {}]
  %s1 = inlined_call_operand.vmem [shape: f32[8,27], index: 1, kind: input, shape index: {}]
  %s2 = inlined_call_operand.vmem [shape: f32[8,1], index: 2, kind: input, shape index: {}]
  %s3 = inlined_call_operand.hbm [shape: f32[2,8,256], index: 3, kind: output, shape index: {}]
  %s4 = sld [smem:[#allocation0]]
  $region45: #{tpu_custom_call.1} parent=0
    _
  %s6 = ssub.s32 1, %s4
  %s7 = scalar_select 0, %s6, %s4
  $region1: #{tpu_custom_call.1} parent=0
    #allocation2 [shape = 'u8[16384]{0}', space=vmem, size = 0x4000, scoped, tag = 'output window, operand 0']
    #allocation3 [shape = 's32[2]{0}', space=sflag, size = 0x8, scoped, tag = 'scoped memory for tpu_custom_call.1']
    %8 = vsyncpa [#allocation3], 0
    %s9 = scalar_lea.sflag [#allocation3], 1
    %10 = vsyncpa %s9, 0
    loop: start=0, step=1, limit=4
    $region2: #{tpu_custom_call.1} parent=1 // loop_pre_header
      _
    $region3: #{tpu_custom_call.1} parent=1 // loop_header
      %s12 = sphi 0, %s16
      %p13 = scmp.ge.s32.totalorder %s12, 4
      %s22 = sphi 0, %s24
      %s25 = sphi 0, %s22
      %s26 = sphi 0, %s25
      %s42 = sphi 0, %s26
      %s46 = sphi 0, %s46
      %s48 = sphi 0, %s46
      %s49 = sphi 0, %s48
      %s63 = sphi 0, %s49
      %s67 = sphi 0, %s67
      %s69 = sphi 0, %s67
      %s70 = sphi 0, %s69
      %s84 = sphi 0, %s70
      %s90 = sphi 0, %s92
      %s93 = sphi 0, %s90
      %s94 = sphi 0, %s93
      %s110 = sphi 0, %s94
    $region4: #{tpu_custom_call.1} parent=1 // loop_header_branch
      %15 = sbr.rel (%p13) target = $region8
    $region5: #{tpu_custom_call.1} parent=1 // loop_body
      %s17 = ssub.s32 %s12, 1
      %s18 = ssub.s32 %s12, 2
      %s19 = sadd.s32 %s12, 1
      %s20 = ssub.s32 %s12, %s19
      %p21 = scmp.eq.s32.totalorder %s20, 0
      %s23 = sadd.s32 %s22, 1
      %s24 = scalar_select %p21, %s22, %s23
      %p27 = pneg %p21
      %p28 = scmp.eq.s32.totalorder %s12, 1
      %p29 = por %p27, %p28
      %p30 = scmp.ne.s32.totalorder %s22, %s25
      %p31 = scmp.eq.s32.totalorder %s12, 0
      %p32 = por %p30, %p31
      %p33 = scmp.ne.s32.totalorder %s22, %s25
      %p34 = scmp.eq.s32.totalorder %s17, 1
      %p35 = por %p33, %p34
      %p36 = scmp.ne.s32.totalorder %s25, %s26
      %p37 = scmp.eq.s32.totalorder %s17, 0
      %p38 = por %p36, %p37
      %p39 = scmp.ne.s32.totalorder %s25, %s26
      %p40 = scmp.eq.s32.totalorder %s18, 1
      %p41 = por %p39, %p40
      %p43 = scmp.ne.s32.totalorder %s26, %s42
      %p44 = scmp.eq.s32.totalorder %s18, 0
      %p45 = por %p43, %p44
      %s47 = sadd.s32 %s46, 1
      %p50 = scmp.eq.s32.totalorder %s12, 1
      %p51 = scmp.ne.s32.totalorder %s46, %s48
      %p52 = scmp.eq.s32.totalorder %s12, 0
      %p53 = por %p51, %p52
      %p54 = scmp.ne.s32.totalorder %s46, %s48
      %p55 = scmp.eq.s32.totalorder %s17, 1
      %p56 = por %p54, %p55
      %p57 = scmp.ne.s32.totalorder %s48, %s49
      %p58 = scmp.eq.s32.totalorder %s17, 0
      %p59 = por %p57, %p58
      %p60 = scmp.ne.s32.totalorder %s48, %s49
      %p61 = scmp.eq.s32.totalorder %s18, 1
      %p62 = por %p60, %p61
      %p64 = scmp.ne.s32.totalorder %s49, %s63
      %p65 = scmp.eq.s32.totalorder %s18, 0
      %p66 = por %p64, %p65
      %s68 = sadd.s32 %s67, 1
      %p71 = scmp.eq.s32.totalorder %s12, 1
      %p72 = scmp.ne.s32.totalorder %s67, %s69
      %p73 = scmp.eq.s32.totalorder %s12, 0
      %p74 = por %p72, %p73
      %p75 = scmp.ne.s32.totalorder %s67, %s69
      %p76 = scmp.eq.s32.totalorder %s17, 1
      %p77 = por %p75, %p76
      %p78 = scmp.ne.s32.totalorder %s69, %s70
      %p79 = scmp.eq.s32.totalorder %s17, 0
      %p80 = por %p78, %p79
      %p81 = scmp.ne.s32.totalorder %s69, %s70
      %p82 = scmp.eq.s32.totalorder %s18, 1
      %p83 = por %p81, %p82
      %p85 = scmp.ne.s32.totalorder %s70, %s84
      %p86 = scmp.eq.s32.totalorder %s18, 0
      %p87 = por %p85, %p86
      %s88 = ssub.s32 %s12, %s19
      %p89 = scmp.eq.s32.totalorder %s88, 0
      %s91 = sadd.s32 %s90, 1
      %s92 = scalar_select %p89, %s90, %s91
      %p95 = pneg %p89
      %p96 = scmp.eq.s32.totalorder %s12, 1
      %p97 = por %p95, %p96
      %p98 = scmp.ne.s32.totalorder %s90, %s93
      %p99 = scmp.eq.s32.totalorder %s12, 0
      %p100 = por %p98, %p99
      %p101 = scmp.ne.s32.totalorder %s90, %s93
      %p102 = scmp.eq.s32.totalorder %s17, 1
      %p103 = por %p101, %p102
      %p104 = scmp.ne.s32.totalorder %s93, %s94
      %p105 = scmp.eq.s32.totalorder %s17, 0
      %p106 = por %p104, %p105
      %p107 = scmp.ne.s32.totalorder %s93, %s94
      %p108 = scmp.eq.s32.totalorder %s18, 1
      %p109 = por %p107, %p108
      %p111 = scmp.ne.s32.totalorder %s94, %s110
      %p112 = scmp.eq.s32.totalorder %s18, 0
      %p113 = por %p111, %p112
      %p114 = scmp.le.s32.totalorder 1, %s12
      %p115 = scmp.lt.s32.totalorder %s12, 3
      %p116 = pnand %p114, %p115
      %p117 = pneg %p116
      // Predicated region
      $region9: #{tpu_custom_call.1} parent=5 // pred_check
        _
      $region10: #{tpu_custom_call.1} parent=5 // pred_check_branch
        %119 = sbr.rel (%p116) target = $region12
      $region11: #{tpu_custom_call.1} parent=5 // pred_region
        %s120 = ssub.s32 %s12, 1
        // Predicated region
        $region13: #{tpu_custom_call.1} parent=11 // pred_check
          %p121 = pneg %p59
        $region14: #{tpu_custom_call.1} parent=11 // pred_check_branch
          %123 = sbr.rel (%p121) target = $region16
        $region15: #{tpu_custom_call.1} parent=11 // pred_region
          _
        $region16: #{tpu_custom_call.1} parent=11 // pred_fallthru
          _
        // Predicated region
        $region17: #{tpu_custom_call.1} parent=11 // pred_check
          %p124 = pneg %p80
        $region18: #{tpu_custom_call.1} parent=11 // pred_check_branch
          %126 = sbr.rel (%p124) target = $region20
        $region19: #{tpu_custom_call.1} parent=11 // pred_region
          _
        $region20: #{tpu_custom_call.1} parent=11 // pred_fallthru
          _
      $region12: #{tpu_custom_call.1} parent=5 // pred_fallthru
        _
      %p127 = scmp.lt.s32.totalorder %s12, 2
      // Predicated region
      $region21: #{tpu_custom_call.1} parent=5 // pred_check
        %p128 = pneg %p127
      $region22: #{tpu_custom_call.1} parent=5 // pred_check_branch
        %130 = sbr.rel (%p128) target = $region24
      $region23: #{tpu_custom_call.1} parent=5 // pred_region
        // Predicated region
        $region25: #{tpu_custom_call.1} parent=23 // pred_check
          %p131 = pneg %p32
        $region26: #{tpu_custom_call.1} parent=23 // pred_check_branch
          %133 = sbr.rel (%p131) target = $region28
        $region27: #{tpu_custom_call.1} parent=23 // pred_region
          %p134 = scmp.lt.s32.totalorder %s12, 1
          %s135 = scalar_select %p134, %s12, 1
          %s136 = smul.addr %s135, 3
          %s137 = smul.addr %s136, 4
          %s138 = scalar_lea.vmem %s0, %s137
        $region28: #{tpu_custom_call.1} parent=23 // pred_fallthru
          _
      $region24: #{tpu_custom_call.1} parent=5 // pred_fallthru
        _
      %p139 = scmp.le.s32.totalorder 1, %s12
      %p140 = scmp.lt.s32.totalorder %s12, 3
      %p141 = pnand %p139, %p140
      %p142 = pneg %p141
      // Predicated region
      $region29: #{tpu_custom_call.1} parent=5 // pred_check
        _
      $region30: #{tpu_custom_call.1} parent=5 // pred_check_branch
        %144 = sbr.rel (%p141) target = $region32
      $region31: #{tpu_custom_call.1} parent=5 // pred_region
        %s145 = ssub.s32 %s12, 1
        %p146 = scmp.lt.s32.totalorder %s17, 1
        %s147 = scalar_select %p146, %s17, 1
        %s148 = smul.addr %s147, 3
        %s149 = smul.addr %s148, 4
        %s150 = scalar_lea.vmem %s0, %s149
        %p151 = pneg %p38
        %p152 = pneg %p35
        %p153 = pneg %p59
        %p154 = pneg %p56
        %p155 = pneg %p80
        %p156 = pneg %p77
        %p157 = pneg %p106
        %p158 = pneg %p103
        %s159 = sand.u32 %s93, 1
        %s160 = scalar_lea.sflag [#allocation3], %s159
        %s161 = sand.u32 %s93, 1
        %s162 = smul.addr %s161, 16
        %s163 = scalar_lea.vmem [#allocation2], %s162
        %p164 = scmp.lt.s32.totalorder %s17, 1
        %s165 = scalar_select %p164, %s17, 1
        %s166 = smul.addr %s165, 3
        %s167 = smul.addr %s166, 4
        %s168 = scalar_lea.vmem %s0, %s167
        %v169 = vld [vmem:[%s168] sm:$0x77]
        %v170 = vld [vmem:[%s168 + $0x8] sm:$0x7]
        %v171 = vld [vmem:[%s1] sm:$0xff]
        %173 = vrot.lane.b32.xlu0 %v171, 125
        %v174 = vpop.permute.xlu0 %173
        %v177 = vcombine.high %v169, %v169
        %178 = vrot.lane.b32.xlu0 %v169, 127
        %v179 = vpop.permute.xlu0 %178
        %180 = vrot.lane.b32.xlu0 %v177, 127
        %v181 = vpop.permute.xlu0 %180
        %182 = vrot.lane.b32.xlu0 %v170, 127
        %v183 = vpop.permute.xlu0 %182
        %vm184 = vcmask 1039360
        %v185 = vsel %vm184, %v179, %v181
        %v186 = vsel %vm184, %v181, %v183
        %vm187 = vcmask 23552
        %v188 = vsel %vm187, %v174, 0
        %vm190 = vcmask 1042432
        %v191 = vsel %vm190, %v185, 0
        %v193 = vsel %vm190, %v186, 0
        %195 = vmatprep.subr.mxu0 0.0
        %196 = vmatpush1.msra.mxu0 0.0
        %197 = vmatprep.subr.mxu0 0.0
        %198 = vmatpush1.msra.mxu0 0.0
        %199 = vmatprep.subr.mxu0 0.0
        %200 = vmatpush1.msra.mxu0 0.0
        %201 = vmatprep.subr.mxu0 0.0
        %202 = vmatpush1.msra.mxu0 0.0
        %203 = vmatprep.subr.mxu0 0.0
        %204 = vmatpush1.msra.mxu0 0.0
        %205 = vmatprep.subr.mxu0 0.0
        %206 = vmatpush1.msra.mxu0 0.0
        %207 = vmatprep.subr.mxu0 0.0
        %208 = vmatpush1.msra.mxu0 0.0
        %209 = vmatprep.subr.mxu0 0.0
        %210 = vmatpush1.msra.mxu0 0.0
        %211 = vmatprep.subr.mxu0 0.0
        %212 = vmatpush1.msra.mxu0 0.0
        %213 = vmatprep.subr.mxu0 0.0
        %214 = vmatpush1.msra.mxu0 0.0
        %215 = vmatprep.subr.mxu0 0.0
        %216 = vmatpush1.msra.mxu0 0.0
        %217 = vmatprep.subr.mxu0 0.0
        %218 = vmatpush1.msra.mxu0 0.0
        %219 = vmatprep.subr.mxu0 0.0
        %220 = vmatpush1.msra.mxu0 0.0
        %221 = vmatprep.subr.mxu0 0.0
        %222 = vmatpush1.msra.mxu0 0.0
        %223 = vmatprep.subr.mxu0 0.0
        %224 = vmatpush1.msra.mxu0 0.0
        %225 = vmatprep.subr.mxu0 %v193
        %226 = vmatpush1.msra.mxu0 %v191
        %227 = vmatprep.subr.mxu0 0.0
        %228 = vmatpush2.msra.mxu0 0.0
        %229 = vmatprep.subr.mxu0 0.0
        %230 = vmatpush2.msra.mxu0 0.0
        %231 = vmatprep.subr.mxu0 0.0
        %232 = vmatpush2.msra.mxu0 0.0
        %233 = vmatprep.subr.mxu0 0.0
        %234 = vmatpush2.msra.mxu0 0.0
        %235 = vmatprep.subr.mxu0 0.0
        %236 = vmatpush2.msra.mxu0 0.0
        %237 = vmatprep.subr.mxu0 0.0
        %238 = vmatpush2.msra.mxu0 0.0
        %239 = vmatprep.subr.mxu0 0.0
        %240 = vmatpush2.msra.mxu0 0.0
        %241 = vmatprep.subr.mxu0 0.0
        %242 = vmatpush2.msra.mxu0 0.0
        %243 = vmatprep.subr.mxu0 0.0
        %244 = vmatpush2.msra.mxu0 0.0
        %245 = vmatprep.subr.mxu0 0.0
        %246 = vmatpush2.msra.mxu0 0.0
        %247 = vmatprep.subr.mxu0 0.0
        %248 = vmatpush2.msra.mxu0 0.0
        %249 = vmatprep.subr.mxu0 0.0
        %250 = vmatpush2.msra.mxu0 0.0
        %251 = vmatprep.subr.mxu0 0.0
        %252 = vmatpush2.msra.mxu0 0.0
        %253 = vmatprep.subr.mxu0 0.0
        %254 = vmatpush2.msra.mxu0 0.0
        %255 = vmatprep.subr.mxu0 0.0
        %256 = vmatpush2.msra.mxu0 0.0
        %257 = vmatprep.subr.mxu0 0.0
        %258 = vmatpush2.msra.mxu0 0.0
        %259 = vmatprep.mubr.f32.mxu0 0.0
        %260 = vmatmul.mubr.f32.gmra.mxu0 %v188
        %v261 = vpop.f32.mrf.mxu0
        %v262 = vadd.f32 0.0, %v261
        %v263 = vpop.f32.mrf.mxu0
        %v264 = vadd.f32 0.0, %v263
        %265 = vdwg.mxu0
        %v266 = vsel %vm187, %v171, 0
        %v268 = vsel %vm190, %v169, 0
        %v270 = vsel %vm190, %v177, 0
        %272 = vmatprep.subr.mxu0 0.0
        %273 = vmatpush1.msra.mxu0 0.0
        %274 = vmatprep.subr.mxu0 0.0
        %275 = vmatpush1.msra.mxu0 0.0
        %276 = vmatprep.subr.mxu0 0.0
        %277 = vmatpush1.msra.mxu0 0.0
        %278 = vmatprep.subr.mxu0 0.0
        %279 = vmatpush1.msra.mxu0 0.0
        %280 = vmatprep.subr.mxu0 0.0
        %281 = vmatpush1.msra.mxu0 0.0
        %282 = vmatprep.subr.mxu0 0.0
        %283 = vmatpush1.msra.mxu0 0.0
        %284 = vmatprep.subr.mxu0 0.0
        %285 = vmatpush1.msra.mxu0 0.0
        %286 = vmatprep.subr.mxu0 0.0
        %287 = vmatpush1.msra.mxu0 0.0
        %288 = vmatprep.subr.mxu0 0.0
        %289 = vmatpush1.msra.mxu0 0.0
        %290 = vmatprep.subr.mxu0 0.0
        %291 = vmatpush1.msra.mxu0 0.0
        %292 = vmatprep.subr.mxu0 0.0
        %293 = vmatpush1.msra.mxu0 0.0
        %294 = vmatprep.subr.mxu0 0.0
        %295 = vmatpush1.msra.mxu0 0.0
        %296 = vmatprep.subr.mxu0 0.0
        %297 = vmatpush1.msra.mxu0 0.0
        %298 = vmatprep.subr.mxu0 0.0
        %299 = vmatpush1.msra.mxu0 0.0
        %300 = vmatprep.subr.mxu0 0.0
        %301 = vmatpush1.msra.mxu0 0.0
        %302 = vmatprep.subr.mxu0 %v270
        %303 = vmatpush1.msra.mxu0 %v268
        %304 = vmatprep.subr.mxu0 0.0
        %305 = vmatpush2.msra.mxu0 0.0
        %306 = vmatprep.subr.mxu0 0.0
        %307 = vmatpush2.msra.mxu0 0.0
        %308 = vmatprep.subr.mxu0 0.0
        %309 = vmatpush2.msra.mxu0 0.0
        %310 = vmatprep.subr.mxu0 0.0
        %311 = vmatpush2.msra.mxu0 0.0
        %312 = vmatprep.subr.mxu0 0.0
        %313 = vmatpush2.msra.mxu0 0.0
        %314 = vmatprep.subr.mxu0 0.0
        %315 = vmatpush2.msra.mxu0 0.0
        %316 = vmatprep.subr.mxu0 0.0
        %317 = vmatpush2.msra.mxu0 0.0
        %318 = vmatprep.subr.mxu0 0.0
        %319 = vmatpush2.msra.mxu0 0.0
        %320 = vmatprep.subr.mxu0 0.0
        %321 = vmatpush2.msra.mxu0 0.0
        %322 = vmatprep.subr.mxu0 0.0
        %323 = vmatpush2.msra.mxu0 0.0
        %324 = vmatprep.subr.mxu0 0.0
        %325 = vmatpush2.msra.mxu0 0.0
        %326 = vmatprep.subr.mxu0 0.0
        %327 = vmatpush2.msra.mxu0 0.0
        %328 = vmatprep.subr.mxu0 0.0
        %329 = vmatpush2.msra.mxu0 0.0
        %330 = vmatprep.subr.mxu0 0.0
        %331 = vmatpush2.msra.mxu0 0.0
        %332 = vmatprep.subr.mxu0 0.0
        %333 = vmatpush2.msra.mxu0 0.0
        %334 = vmatprep.subr.mxu0 0.0
        %335 = vmatpush2.msra.mxu0 0.0
        %336 = vmatprep.mubr.f32.mxu0 0.0
        %337 = vmatmul.mubr.f32.gmra.mxu0 %v266
        %v338 = vpop.f32.mrf.mxu0
        %v339 = vadd.f32 %v262, %v338
        %v340 = vpop.f32.mrf.mxu0
        %v341 = vadd.f32 %v264, %v340
        %342 = vdwg.mxu0
        %343 = vrot.lane.b32.xlu0 %v171, 122
        %v344 = vpop.permute.xlu0 %343
        %345 = vrot.lane.b32.xlu0 %v169, 126
        %v346 = vpop.permute.xlu0 %345
        %347 = vrot.lane.b32.xlu0 %v177, 126
        %v348 = vpop.permute.xlu0 %347
        %349 = vrot.lane.b32.xlu0 %v170, 126
        %v350 = vpop.permute.xlu0 %349
        %vm351 = vcmask 1031168
        %v352 = vsel %vm351, %v346, %v348
        %v353 = vsel %vm351, %v348, %v350
        %v354 = vsel %vm187, %v344, 0
        %v356 = vsel %vm190, %v352, 0
        %v358 = vsel %vm190, %v353, 0
        %360 = vmatprep.subr.mxu0 0.0
        %361 = vmatpush1.msra.mxu0 0.0
        %362 = vmatprep.subr.mxu0 0.0
        %363 = vmatpush1.msra.mxu0 0.0
        %364 = vmatprep.subr.mxu0 0.0
        %365 = vmatpush1.msra.mxu0 0.0
        %366 = vmatprep.subr.mxu0 0.0
        %367 = vmatpush1.msra.mxu0 0.0
        %368 = vmatprep.subr.mxu0 0.0
        %369 = vmatpush1.msra.mxu0 0.0
        %370 = vmatprep.subr.mxu0 0.0
        %371 = vmatpush1.msra.mxu0 0.0
        %372 = vmatprep.subr.mxu0 0.0
        %373 = vmatpush1.msra.mxu0 0.0
        %374 = vmatprep.subr.mxu0 0.0
        %375 = vmatpush1.msra.mxu0 0.0
        %376 = vmatprep.subr.mxu0 0.0
        %377 = vmatpush1.msra.mxu0 0.0
        %378 = vmatprep.subr.mxu0 0.0
        %379 = vmatpush1.msra.mxu0 0.0
        %380 = vmatprep.subr.mxu0 0.0
        %381 = vmatpush1.msra.mxu0 0.0
        %382 = vmatprep.subr.mxu0 0.0
        %383 = vmatpush1.msra.mxu0 0.0
        %384 = vmatprep.subr.mxu0 0.0
        %385 = vmatpush1.msra.mxu0 0.0
        %386 = vmatprep.subr.mxu0 0.0
        %387 = vmatpush1.msra.mxu0 0.0
        %388 = vmatprep.subr.mxu0 0.0
        %389 = vmatpush1.msra.mxu0 0.0
        %390 = vmatprep.subr.mxu0 %v358
        %391 = vmatpush1.msra.mxu0 %v356
        %392 = vmatprep.subr.mxu0 0.0
        %393 = vmatpush2.msra.mxu0 0.0
        %394 = vmatprep.subr.mxu0 0.0
        %395 = vmatpush2.msra.mxu0 0.0
        %396 = vmatprep.subr.mxu0 0.0
        %397 = vmatpush2.msra.mxu0 0.0
        %398 = vmatprep.subr.mxu0 0.0
        %399 = vmatpush2.msra.mxu0 0.0
        %400 = vmatprep.subr.mxu0 0.0
        %401 = vmatpush2.msra.mxu0 0.0
        %402 = vmatprep.subr.mxu0 0.0
        %403 = vmatpush2.msra.mxu0 0.0
        %404 = vmatprep.subr.mxu0 0.0
        %405 = vmatpush2.msra.mxu0 0.0
        %406 = vmatprep.subr.mxu0 0.0
        %407 = vmatpush2.msra.mxu0 0.0
        %408 = vmatprep.subr.mxu0 0.0
        %409 = vmatpush2.msra.mxu0 0.0
        %410 = vmatprep.subr.mxu0 0.0
        %411 = vmatpush2.msra.mxu0 0.0
        %412 = vmatprep.subr.mxu0 0.0
        %413 = vmatpush2.msra.mxu0 0.0
        %414 = vmatprep.subr.mxu0 0.0
        %415 = vmatpush2.msra.mxu0 0.0
        %416 = vmatprep.subr.mxu0 0.0
        %417 = vmatpush2.msra.mxu0 0.0
        %418 = vmatprep.subr.mxu0 0.0
        %419 = vmatpush2.msra.mxu0 0.0
        %420 = vmatprep.subr.mxu0 0.0
        %421 = vmatpush2.msra.mxu0 0.0
        %422 = vmatprep.subr.mxu0 0.0
        %423 = vmatpush2.msra.mxu0 0.0
        %424 = vmatprep.mubr.f32.mxu0 0.0
        %425 = vmatmul.mubr.f32.gmra.mxu0 %v354
        %v426 = vpop.f32.mrf.mxu0
        %v427 = vadd.f32 0.0, %v426
        %v428 = vpop.f32.mrf.mxu0
        %v429 = vadd.f32 0.0, %v428
        %430 = vdwg.mxu0
        %v431 = vadd.f32 %v339, %v427
        %v432 = vadd.f32 %v341, %v429
        %433 = vrot.lane.b32.xlu0 %v171, 119
        %v434 = vpop.permute.xlu0 %433
        %435 = vrot.lane.b32.xlu0 %v169, 112
        %v436 = vpop.permute.xlu0 %435
        %437 = vrot.lane.b32.xlu0 %v177, 112
        %v438 = vpop.permute.xlu0 %437
        %439 = vrot.lane.b32.xlu0 %v170, 112
        %v440 = vpop.permute.xlu0 %439
        %vm441 = vcmask 916480
        %v442 = vsel %vm441, %v436, %v438
        %v443 = vsel %vm441, %v438, %v440
        %v444 = vsel %vm187, %v434, 0
        %v446 = vsel %vm190, %v442, 0
        %v448 = vsel %vm190, %v443, 0
        %450 = vmatprep.subr.mxu0 0.0
        %451 = vmatpush1.msra.mxu0 0.0
        %452 = vmatprep.subr.mxu0 0.0
        %453 = vmatpush1.msra.mxu0 0.0
        %454 = vmatprep.subr.mxu0 0.0
        %455 = vmatpush1.msra.mxu0 0.0
        %456 = vmatprep.subr.mxu0 0.0
        %457 = vmatpush1.msra.mxu0 0.0
        %458 = vmatprep.subr.mxu0 0.0
        %459 = vmatpush1.msra.mxu0 0.0
        %460 = vmatprep.subr.mxu0 0.0
        %461 = vmatpush1.msra.mxu0 0.0
        %462 = vmatprep.subr.mxu0 0.0
        %463 = vmatpush1.msra.mxu0 0.0
        %464 = vmatprep.subr.mxu0 0.0
        %465 = vmatpush1.msra.mxu0 0.0
        %466 = vmatprep.subr.mxu0 0.0
        %467 = vmatpush1.msra.mxu0 0.0
        %468 = vmatprep.subr.mxu0 0.0
        %469 = vmatpush1.msra.mxu0 0.0
        %470 = vmatprep.subr.mxu0 0.0
        %471 = vmatpush1.msra.mxu0 0.0
        %472 = vmatprep.subr.mxu0 0.0
        %473 = vmatpush1.msra.mxu0 0.0
        %474 = vmatprep.subr.mxu0 0.0
        %475 = vmatpush1.msra.mxu0 0.0
        %476 = vmatprep.subr.mxu0 0.0
        %477 = vmatpush1.msra.mxu0 0.0
        %478 = vmatprep.subr.mxu0 0.0
        %479 = vmatpush1.msra.mxu0 0.0
        %480 = vmatprep.subr.mxu0 %v448
        %481 = vmatpush1.msra.mxu0 %v446
        %482 = vmatprep.subr.mxu0 0.0
        %483 = vmatpush2.msra.mxu0 0.0
        %484 = vmatprep.subr.mxu0 0.0
        %485 = vmatpush2.msra.mxu0 0.0
        %486 = vmatprep.subr.mxu0 0.0
        %487 = vmatpush2.msra.mxu0 0.0
        %488 = vmatprep.subr.mxu0 0.0
        %489 = vmatpush2.msra.mxu0 0.0
        %490 = vmatprep.subr.mxu0 0.0
        %491 = vmatpush2.msra.mxu0 0.0
        %492 = vmatprep.subr.mxu0 0.0
        %493 = vmatpush2.msra.mxu0 0.0
        %494 = vmatprep.subr.mxu0 0.0
        %495 = vmatpush2.msra.mxu0 0.0
        %496 = vmatprep.subr.mxu0 0.0
        %497 = vmatpush2.msra.mxu0 0.0
        %498 = vmatprep.subr.mxu0 0.0
        %499 = vmatpush2.msra.mxu0 0.0
        %500 = vmatprep.subr.mxu0 0.0
        %501 = vmatpush2.msra.mxu0 0.0
        %502 = vmatprep.subr.mxu0 0.0
        %503 = vmatpush2.msra.mxu0 0.0
        %504 = vmatprep.subr.mxu0 0.0
        %505 = vmatpush2.msra.mxu0 0.0
        %506 = vmatprep.subr.mxu0 0.0
        %507 = vmatpush2.msra.mxu0 0.0
        %508 = vmatprep.subr.mxu0 0.0
        %509 = vmatpush2.msra.mxu0 0.0
        %510 = vmatprep.subr.mxu0 0.0
        %511 = vmatpush2.msra.mxu0 0.0
        %512 = vmatprep.subr.mxu0 0.0
        %513 = vmatpush2.msra.mxu0 0.0
        %514 = vmatprep.mubr.f32.mxu0 0.0
        %515 = vmatmul.mubr.f32.gmra.mxu0 %v444
        %v516 = vpop.f32.mrf.mxu0
        %v517 = vadd.f32 0.0, %v516
        %v518 = vpop.f32.mrf.mxu0
        %v519 = vadd.f32 0.0, %v518
        %520 = vdwg.mxu0
        %v521 = vadd.f32 %v431, %v517
        %v522 = vadd.f32 %v432, %v519
        %523 = vrot.lane.b32.xlu0 %v171, 116
        %v524 = vpop.permute.xlu0 %523
        %525 = vrot.lane.b32.xlu0 %v169, 111
        %v526 = vpop.permute.xlu0 %525
        %527 = vrot.lane.b32.xlu0 %v177, 111
        %v528 = vpop.permute.xlu0 %527
        %529 = vrot.lane.b32.xlu0 %v170, 111
        %v530 = vpop.permute.xlu0 %529
        %vm531 = vcmask 908288
        %v532 = vsel %vm531, %v526, %v528
        %v533 = vsel %vm531, %v528, %v530
        %v534 = vsel %vm187, %v524, 0
        %v536 = vsel %vm190, %v532, 0
        %v538 = vsel %vm190, %v533, 0
        %540 = vmatprep.subr.mxu0 0.0
        %541 = vmatpush1.msra.mxu0 0.0
        %542 = vmatprep.subr.mxu0 0.0
        %543 = vmatpush1.msra.mxu0 0.0
        %544 = vmatprep.subr.mxu0 0.0
        %545 = vmatpush1.msra.mxu0 0.0
        %546 = vmatprep.subr.mxu0 0.0
        %547 = vmatpush1.msra.mxu0 0.0
        %548 = vmatprep.subr.mxu0 0.0
        %549 = vmatpush1.msra.mxu0 0.0
        %550 = vmatprep.subr.mxu0 0.0
        %551 = vmatpush1.msra.mxu0 0.0
        %552 = vmatprep.subr.mxu0 0.0
        %553 = vmatpush1.msra.mxu0 0.0
        %554 = vmatprep.subr.mxu0 0.0
        %555 = vmatpush1.msra.mxu0 0.0
        %556 = vmatprep.subr.mxu0 0.0
        %557 = vmatpush1.msra.mxu0 0.0
        %558 = vmatprep.subr.mxu0 0.0
        %559 = vmatpush1.msra.mxu0 0.0
        %560 = vmatprep.subr.mxu0 0.0
        %561 = vmatpush1.msra.mxu0 0.0
        %562 = vmatprep.subr.mxu0 0.0
        %563 = vmatpush1.msra.mxu0 0.0
        %564 = vmatprep.subr.mxu0 0.0
        %565 = vmatpush1.msra.mxu0 0.0
        %566 = vmatprep.subr.mxu0 0.0
        %567 = vmatpush1.msra.mxu0 0.0
        %568 = vmatprep.subr.mxu0 0.0
        %569 = vmatpush1.msra.mxu0 0.0
        %570 = vmatprep.subr.mxu0 %v538
        %571 = vmatpush1.msra.mxu0 %v536
        %572 = vmatprep.subr.mxu0 0.0
        %573 = vmatpush2.msra.mxu0 0.0
        %574 = vmatprep.subr.mxu0 0.0
        %575 = vmatpush2.msra.mxu0 0.0
        %576 = vmatprep.subr.mxu0 0.0
        %577 = vmatpush2.msra.mxu0 0.0
        %578 = vmatprep.subr.mxu0 0.0
        %579 = vmatpush2.msra.mxu0 0.0
        %580 = vmatprep.subr.mxu0 0.0
        %581 = vmatpush2.msra.mxu0 0.0
        %582 = vmatprep.subr.mxu0 0.0
        %583 = vmatpush2.msra.mxu0 0.0
        %584 = vmatprep.subr.mxu0 0.0
        %585 = vmatpush2.msra.mxu0 0.0
        %586 = vmatprep.subr.mxu0 0.0
        %587 = vmatpush2.msra.mxu0 0.0
        %588 = vmatprep.subr.mxu0 0.0
        %589 = vmatpush2.msra.mxu0 0.0
        %590 = vmatprep.subr.mxu0 0.0
        %591 = vmatpush2.msra.mxu0 0.0
        %592 = vmatprep.subr.mxu0 0.0
        %593 = vmatpush2.msra.mxu0 0.0
        %594 = vmatprep.subr.mxu0 0.0
        %595 = vmatpush2.msra.mxu0 0.0
        %596 = vmatprep.subr.mxu0 0.0
        %597 = vmatpush2.msra.mxu0 0.0
        %598 = vmatprep.subr.mxu0 0.0
        %599 = vmatpush2.msra.mxu0 0.0
        %600 = vmatprep.subr.mxu0 0.0
        %601 = vmatpush2.msra.mxu0 0.0
        %602 = vmatprep.subr.mxu0 0.0
        %603 = vmatpush2.msra.mxu0 0.0
        %604 = vmatprep.mubr.f32.mxu0 0.0
        %605 = vmatmul.mubr.f32.gmra.mxu0 %v534
        %v606 = vpop.f32.mrf.mxu0
        %v607 = vadd.f32 0.0, %v606
        %v608 = vpop.f32.mrf.mxu0
        %v609 = vadd.f32 0.0, %v608
        %610 = vdwg.mxu0
        %v611 = vadd.f32 %v521, %v607
        %v612 = vadd.f32 %v522, %v609
        %613 = vrot.lane.b32.xlu0 %v171, 113
        %v614 = vpop.permute.xlu0 %613
        %615 = vrot.lane.b32.xlu0 %v169, 110
        %v616 = vpop.permute.xlu0 %615
        %617 = vrot.lane.b32.xlu0 %v177, 110
        %v618 = vpop.permute.xlu0 %617
        %619 = vrot.lane.b32.xlu0 %v170, 110
        %v620 = vpop.permute.xlu0 %619
        %vm621 = vcmask 900096
        %v622 = vsel %vm621, %v616, %v618
        %v623 = vsel %vm621, %v618, %v620
        %v624 = vsel %vm187, %v614, 0
        %v626 = vsel %vm190, %v622, 0
        %v628 = vsel %vm190, %v623, 0
        %630 = vmatprep.subr.mxu0 0.0
        %631 = vmatpush1.msra.mxu0 0.0
        %632 = vmatprep.subr.mxu0 0.0
        %633 = vmatpush1.msra.mxu0 0.0
        %634 = vmatprep.subr.mxu0 0.0
        %635 = vmatpush1.msra.mxu0 0.0
        %636 = vmatprep.subr.mxu0 0.0
        %637 = vmatpush1.msra.mxu0 0.0
        %638 = vmatprep.subr.mxu0 0.0
        %639 = vmatpush1.msra.mxu0 0.0
        %640 = vmatprep.subr.mxu0 0.0
        %641 = vmatpush1.msra.mxu0 0.0
        %642 = vmatprep.subr.mxu0 0.0
        %643 = vmatpush1.msra.mxu0 0.0
        %644 = vmatprep.subr.mxu0 0.0
        %645 = vmatpush1.msra.mxu0 0.0
        %646 = vmatprep.subr.mxu0 0.0
        %647 = vmatpush1.msra.mxu0 0.0
        %648 = vmatprep.subr.mxu0 0.0
        %649 = vmatpush1.msra.mxu0 0.0
        %650 = vmatprep.subr.mxu0 0.0
        %651 = vmatpush1.msra.mxu0 0.0
        %652 = vmatprep.subr.mxu0 0.0
        %653 = vmatpush1.msra.mxu0 0.0
        %654 = vmatprep.subr.mxu0 0.0
        %655 = vmatpush1.msra.mxu0 0.0
        %656 = vmatprep.subr.mxu0 0.0
        %657 = vmatpush1.msra.mxu0 0.0
        %658 = vmatprep.subr.mxu0 0.0
        %659 = vmatpush1.msra.mxu0 0.0
        %660 = vmatprep.subr.mxu0 %v628
        %661 = vmatpush1.msra.mxu0 %v626
        %662 = vmatprep.subr.mxu0 0.0
        %663 = vmatpush2.msra.mxu0 0.0
        %664 = vmatprep.subr.mxu0 0.0
        %665 = vmatpush2.msra.mxu0 0.0
        %666 = vmatprep.subr.mxu0 0.0
        %667 = vmatpush2.msra.mxu0 0.0
        %668 = vmatprep.subr.mxu0 0.0
        %669 = vmatpush2.msra.mxu0 0.0
        %670 = vmatprep.subr.mxu0 0.0
        %671 = vmatpush2.msra.mxu0 0.0
        %672 = vmatprep.subr.mxu0 0.0
        %673 = vmatpush2.msra.mxu0 0.0
        %674 = vmatprep.subr.mxu0 0.0
        %675 = vmatpush2.msra.mxu0 0.0
        %676 = vmatprep.subr.mxu0 0.0
        %677 = vmatpush2.msra.mxu0 0.0
        %678 = vmatprep.subr.mxu0 0.0
        %679 = vmatpush2.msra.mxu0 0.0
        %680 = vmatprep.subr.mxu0 0.0
        %681 = vmatpush2.msra.mxu0 0.0
        %682 = vmatprep.subr.mxu0 0.0
        %683 = vmatpush2.msra.mxu0 0.0
        %684 = vmatprep.subr.mxu0 0.0
        %685 = vmatpush2.msra.mxu0 0.0
        %686 = vmatprep.subr.mxu0 0.0
        %687 = vmatpush2.msra.mxu0 0.0
        %688 = vmatprep.subr.mxu0 0.0
        %689 = vmatpush2.msra.mxu0 0.0
        %690 = vmatprep.subr.mxu0 0.0
        %691 = vmatpush2.msra.mxu0 0.0
        %692 = vmatprep.subr.mxu0 0.0
        %693 = vmatpush2.msra.mxu0 0.0
        %694 = vmatprep.mubr.f32.mxu0 0.0
        %695 = vmatmul.mubr.f32.gmra.mxu0 %v624
        %v696 = vpop.f32.mrf.mxu0
        %v697 = vadd.f32 0.0, %v696
        %v698 = vpop.f32.mrf.mxu0
        %v699 = vadd.f32 0.0, %v698
        %700 = vdwg.mxu0
        %v701 = vadd.f32 %v611, %v697
        %v702 = vadd.f32 %v612, %v699
        %703 = vrot.lane.b32.xlu0 %v171, 110
        %v704 = vpop.permute.xlu0 %703
        %705 = vrot.lane.b32.xlu0 %v169, 96
        %v706 = vpop.permute.xlu0 %705
        %707 = vrot.lane.b32.xlu0 %v177, 96
        %v708 = vpop.permute.xlu0 %707
        %709 = vrot.lane.b32.xlu0 %v170, 96
        %v710 = vpop.permute.xlu0 %709
        %vm711 = vcmask 785408
        %v712 = vsel %vm711, %v706, %v708
        %v713 = vsel %vm711, %v708, %v710
        %v714 = vsel %vm187, %v704, 0
        %v716 = vsel %vm190, %v712, 0
        %v718 = vsel %vm190, %v713, 0
        %720 = vmatprep.subr.mxu0 0.0
        %721 = vmatpush1.msra.mxu0 0.0
        %722 = vmatprep.subr.mxu0 0.0
        %723 = vmatpush1.msra.mxu0 0.0
        %724 = vmatprep.subr.mxu0 0.0
        %725 = vmatpush1.msra.mxu0 0.0
        %726 = vmatprep.subr.mxu0 0.0
        %727 = vmatpush1.msra.mxu0 0.0
        %728 = vmatprep.subr.mxu0 0.0
        %729 = vmatpush1.msra.mxu0 0.0
        %730 = vmatprep.subr.mxu0 0.0
        %731 = vmatpush1.msra.mxu0 0.0
        %732 = vmatprep.subr.mxu0 0.0
        %733 = vmatpush1.msra.mxu0 0.0
        %734 = vmatprep.subr.mxu0 0.0
        %735 = vmatpush1.msra.mxu0 0.0
        %736 = vmatprep.subr.mxu0 0.0
        %737 = vmatpush1.msra.mxu0 0.0
        %738 = vmatprep.subr.mxu0 0.0
        %739 = vmatpush1.msra.mxu0 0.0
        %740 = vmatprep.subr.mxu0 0.0
        %741 = vmatpush1.msra.mxu0 0.0
        %742 = vmatprep.subr.mxu0 0.0
        %743 = vmatpush1.msra.mxu0 0.0
        %744 = vmatprep.subr.mxu0 0.0
        %745 = vmatpush1.msra.mxu0 0.0
        %746 = vmatprep.subr.mxu0 0.0
        %747 = vmatpush1.msra.mxu0 0.0
        %748 = vmatprep.subr.mxu0 0.0
        %749 = vmatpush1.msra.mxu0 0.0
        %750 = vmatprep.subr.mxu0 %v718
        %751 = vmatpush1.msra.mxu0 %v716
        %752 = vmatprep.subr.mxu0 0.0
        %753 = vmatpush2.msra.mxu0 0.0
        %754 = vmatprep.subr.mxu0 0.0
        %755 = vmatpush2.msra.mxu0 0.0
        %756 = vmatprep.subr.mxu0 0.0
        %757 = vmatpush2.msra.mxu0 0.0
        %758 = vmatprep.subr.mxu0 0.0
        %759 = vmatpush2.msra.mxu0 0.0
        %760 = vmatprep.subr.mxu0 0.0
        %761 = vmatpush2.msra.mxu0 0.0
        %762 = vmatprep.subr.mxu0 0.0
        %763 = vmatpush2.msra.mxu0 0.0
        %764 = vmatprep.subr.mxu0 0.0
        %765 = vmatpush2.msra.mxu0 0.0
        %766 = vmatprep.subr.mxu0 0.0
        %767 = vmatpush2.msra.mxu0 0.0
        %768 = vmatprep.subr.mxu0 0.0
        %769 = vmatpush2.msra.mxu0 0.0
        %770 = vmatprep.subr.mxu0 0.0
        %771 = vmatpush2.msra.mxu0 0.0
        %772 = vmatprep.subr.mxu0 0.0
        %773 = vmatpush2.msra.mxu0 0.0
        %774 = vmatprep.subr.mxu0 0.0
        %775 = vmatpush2.msra.mxu0 0.0
        %776 = vmatprep.subr.mxu0 0.0
        %777 = vmatpush2.msra.mxu0 0.0
        %778 = vmatprep.subr.mxu0 0.0
        %779 = vmatpush2.msra.mxu0 0.0
        %780 = vmatprep.subr.mxu0 0.0
        %781 = vmatpush2.msra.mxu0 0.0
        %782 = vmatprep.subr.mxu0 0.0
        %783 = vmatpush2.msra.mxu0 0.0
        %784 = vmatprep.mubr.f32.mxu0 0.0
        %785 = vmatmul.mubr.f32.gmra.mxu0 %v714
        %v786 = vpop.f32.mrf.mxu0
        %v787 = vadd.f32 0.0, %v786
        %v788 = vpop.f32.mrf.mxu0
        %v789 = vadd.f32 0.0, %v788
        %790 = vdwg.mxu0
        %v791 = vadd.f32 %v701, %v787
        %v792 = vadd.f32 %v702, %v789
        %793 = vrot.lane.b32.xlu0 %v171, 107
        %v794 = vpop.permute.xlu0 %793
        %795 = vrot.lane.b32.xlu0 %v169, 95
        %v796 = vpop.permute.xlu0 %795
        %797 = vrot.lane.b32.xlu0 %v177, 95
        %v798 = vpop.permute.xlu0 %797
        %799 = vrot.lane.b32.xlu0 %v170, 95
        %v800 = vpop.permute.xlu0 %799
        %vm801 = vcmask 777216
        %v802 = vsel %vm801, %v796, %v798
        %v803 = vsel %vm801, %v798, %v800
        %v804 = vsel %vm187, %v794, 0
        %v806 = vsel %vm190, %v802, 0
        %v808 = vsel %vm190, %v803, 0
        %810 = vmatprep.subr.mxu0 0.0
        %811 = vmatpush1.msra.mxu0 0.0
        %812 = vmatprep.subr.mxu0 0.0
        %813 = vmatpush1.msra.mxu0 0.0
        %814 = vmatprep.subr.mxu0 0.0
        %815 = vmatpush1.msra.mxu0 0.0
        %816 = vmatprep.subr.mxu0 0.0
        %817 = vmatpush1.msra.mxu0 0.0
        %818 = vmatprep.subr.mxu0 0.0
        %819 = vmatpush1.msra.mxu0 0.0
        %820 = vmatprep.subr.mxu0 0.0
        %821 = vmatpush1.msra.mxu0 0.0
        %822 = vmatprep.subr.mxu0 0.0
        %823 = vmatpush1.msra.mxu0 0.0
        %824 = vmatprep.subr.mxu0 0.0
        %825 = vmatpush1.msra.mxu0 0.0
        %826 = vmatprep.subr.mxu0 0.0
        %827 = vmatpush1.msra.mxu0 0.0
        %828 = vmatprep.subr.mxu0 0.0
        %829 = vmatpush1.msra.mxu0 0.0
        %830 = vmatprep.subr.mxu0 0.0
        %831 = vmatpush1.msra.mxu0 0.0
        %832 = vmatprep.subr.mxu0 0.0
        %833 = vmatpush1.msra.mxu0 0.0
        %834 = vmatprep.subr.mxu0 0.0
        %835 = vmatpush1.msra.mxu0 0.0
        %836 = vmatprep.subr.mxu0 0.0
        %837 = vmatpush1.msra.mxu0 0.0
        %838 = vmatprep.subr.mxu0 0.0
        %839 = vmatpush1.msra.mxu0 0.0
        %840 = vmatprep.subr.mxu0 %v808
        %841 = vmatpush1.msra.mxu0 %v806
        %842 = vmatprep.subr.mxu0 0.0
        %843 = vmatpush2.msra.mxu0 0.0
        %844 = vmatprep.subr.mxu0 0.0
        %845 = vmatpush2.msra.mxu0 0.0
        %846 = vmatprep.subr.mxu0 0.0
        %847 = vmatpush2.msra.mxu0 0.0
        %848 = vmatprep.subr.mxu0 0.0
        %849 = vmatpush2.msra.mxu0 0.0
        %850 = vmatprep.subr.mxu0 0.0
        %851 = vmatpush2.msra.mxu0 0.0
        %852 = vmatprep.subr.mxu0 0.0
        %853 = vmatpush2.msra.mxu0 0.0
        %854 = vmatprep.subr.mxu0 0.0
        %855 = vmatpush2.msra.mxu0 0.0
        %856 = vmatprep.subr.mxu0 0.0
        %857 = vmatpush2.msra.mxu0 0.0
        %858 = vmatprep.subr.mxu0 0.0
        %859 = vmatpush2.msra.mxu0 0.0
        %860 = vmatprep.subr.mxu0 0.0
        %861 = vmatpush2.msra.mxu0 0.0
        %862 = vmatprep.subr.mxu0 0.0
        %863 = vmatpush2.msra.mxu0 0.0
        %864 = vmatprep.subr.mxu0 0.0
        %865 = vmatpush2.msra.mxu0 0.0
        %866 = vmatprep.subr.mxu0 0.0
        %867 = vmatpush2.msra.mxu0 0.0
        %868 = vmatprep.subr.mxu0 0.0
        %869 = vmatpush2.msra.mxu0 0.0
        %870 = vmatprep.subr.mxu0 0.0
        %871 = vmatpush2.msra.mxu0 0.0
        %872 = vmatprep.subr.mxu0 0.0
        %873 = vmatpush2.msra.mxu0 0.0
        %874 = vmatprep.mubr.f32.mxu0 0.0
        %875 = vmatmul.mubr.f32.gmra.mxu0 %v804
        %v876 = vpop.f32.mrf.mxu0
        %v877 = vadd.f32 0.0, %v876
        %v878 = vpop.f32.mrf.mxu0
        %v879 = vadd.f32 0.0, %v878
        %880 = vdwg.mxu0
        %v881 = vadd.f32 %v791, %v877
        %v882 = vadd.f32 %v792, %v879
        %883 = vrot.lane.b32.xlu0 %v171, 104
        %v884 = vpop.permute.xlu0 %883
        %885 = vrot.lane.b32.xlu0 %v169, 94
        %v886 = vpop.permute.xlu0 %885
        %887 = vrot.lane.b32.xlu0 %v177, 94
        %v888 = vpop.permute.xlu0 %887
        %889 = vrot.lane.b32.xlu0 %v170, 94
        %v890 = vpop.permute.xlu0 %889
        %vm891 = vcmask 769024
        %v892 = vsel %vm891, %v886, %v888
        %v893 = vsel %vm891, %v888, %v890
        %v894 = vsel %vm187, %v884, 0
        %v896 = vsel %vm190, %v892, 0
        %v898 = vsel %vm190, %v893, 0
        %900 = vmatprep.subr.mxu0 0.0
        %901 = vmatpush1.msra.mxu0 0.0
        %902 = vmatprep.subr.mxu0 0.0
        %903 = vmatpush1.msra.mxu0 0.0
        %904 = vmatprep.subr.mxu0 0.0
        %905 = vmatpush1.msra.mxu0 0.0
        %906 = vmatprep.subr.mxu0 0.0
        %907 = vmatpush1.msra.mxu0 0.0
        %908 = vmatprep.subr.mxu0 0.0
        %909 = vmatpush1.msra.mxu0 0.0
        %910 = vmatprep.subr.mxu0 0.0
        %911 = vmatpush1.msra.mxu0 0.0
        %912 = vmatprep.subr.mxu0 0.0
        %913 = vmatpush1.msra.mxu0 0.0
        %914 = vmatprep.subr.mxu0 0.0
        %915 = vmatpush1.msra.mxu0 0.0
        %916 = vmatprep.subr.mxu0 0.0
        %917 = vmatpush1.msra.mxu0 0.0
        %918 = vmatprep.subr.mxu0 0.0
        %919 = vmatpush1.msra.mxu0 0.0
        %920 = vmatprep.subr.mxu0 0.0
        %921 = vmatpush1.msra.mxu0 0.0
        %922 = vmatprep.subr.mxu0 0.0
        %923 = vmatpush1.msra.mxu0 0.0
        %924 = vmatprep.subr.mxu0 0.0
        %925 = vmatpush1.msra.mxu0 0.0
        %926 = vmatprep.subr.mxu0 0.0
        %927 = vmatpush1.msra.mxu0 0.0
        %928 = vmatprep.subr.mxu0 0.0
        %929 = vmatpush1.msra.mxu0 0.0
        %930 = vmatprep.subr.mxu0 %v898
        %931 = vmatpush1.msra.mxu0 %v896
        %932 = vmatprep.subr.mxu0 0.0
        %933 = vmatpush2.msra.mxu0 0.0
        %934 = vmatprep.subr.mxu0 0.0
        %935 = vmatpush2.msra.mxu0 0.0
        %936 = vmatprep.subr.mxu0 0.0
        %937 = vmatpush2.msra.mxu0 0.0
        %938 = vmatprep.subr.mxu0 0.0
        %939 = vmatpush2.msra.mxu0 0.0
        %940 = vmatprep.subr.mxu0 0.0
        %941 = vmatpush2.msra.mxu0 0.0
        %942 = vmatprep.subr.mxu0 0.0
        %943 = vmatpush2.msra.mxu0 0.0
        %944 = vmatprep.subr.mxu0 0.0
        %945 = vmatpush2.msra.mxu0 0.0
        %946 = vmatprep.subr.mxu0 0.0
        %947 = vmatpush2.msra.mxu0 0.0
        %948 = vmatprep.subr.mxu0 0.0
        %949 = vmatpush2.msra.mxu0 0.0
        %950 = vmatprep.subr.mxu0 0.0
        %951 = vmatpush2.msra.mxu0 0.0
        %952 = vmatprep.subr.mxu0 0.0
        %953 = vmatpush2.msra.mxu0 0.0
        %954 = vmatprep.subr.mxu0 0.0
        %955 = vmatpush2.msra.mxu0 0.0
        %956 = vmatprep.subr.mxu0 0.0
        %957 = vmatpush2.msra.mxu0 0.0
        %958 = vmatprep.subr.mxu0 0.0
        %959 = vmatpush2.msra.mxu0 0.0
        %960 = vmatprep.subr.mxu0 0.0
        %961 = vmatpush2.msra.mxu0 0.0
        %962 = vmatprep.subr.mxu0 0.0
        %963 = vmatpush2.msra.mxu0 0.0
        %964 = vmatprep.mubr.f32.mxu0 0.0
        %965 = vmatmul.mubr.f32.gmra.mxu0 %v894
        %v966 = vpop.f32.mrf.mxu0
        %v967 = vadd.f32 0.0, %v966
        %v968 = vpop.f32.mrf.mxu0
        %v969 = vadd.f32 0.0, %v968
        %970 = vdwg.mxu0
        %v971 = vadd.f32 %v881, %v967
        %v972 = vadd.f32 %v882, %v969
        %v973 = vld [vmem:[%s2] sm:$0xff]
        %975 = vset.pattern.permute.xlu0 0
        %976 = vperm.xlu0 %975, %v973
        %v977 = vpop.permute.xlu0 %976
        %v979 = vadd.f32 %v971, %v977
        %v980 = vadd.f32 %v972, %v977
        %981 = vst [vmem:[%s163] sm:$0xff] %v979
        %982 = vst [vmem:[%s163 + $0x8] sm:$0xff] %v980
        %s983 = sand.u32 %s93, 1
        %s984 = scalar_lea.sflag [#allocation3], %s983
        %s985 = sand.u32 %s93, 1
        %s986 = smul.addr %s985, 16
        %s987 = scalar_lea.vmem [#allocation2], %s986
        // Predicated region
        $region33: #{tpu_custom_call.1} parent=31 // pred_check
          %p988 = pneg %p103
        $region34: #{tpu_custom_call.1} parent=31 // pred_check_branch
          %990 = sbr.rel (%p988) target = $region36
        $region35: #{tpu_custom_call.1} parent=31 // pred_region
          %s992 = ssub.s32 256, 256
          %993 = vsyncadd %s984, %s992
          %s994 = smul.addr %s17, 2
          %s995 = smul.addr %s994, 128
          %s996 = scalar_lea.hbm %s3, %s995
          %s998 = sshll.u32 %s987, 4
          %s999 = int_to_ptr.vmem [resolvable:$true] %s998
          %1001 = dma.vmem_to_hbm [thread:$0]  %s999, 256, %s996, %s984
        $region36: #{tpu_custom_call.1} parent=31 // pred_fallthru
          _
      $region32: #{tpu_custom_call.1} parent=5 // pred_fallthru
        _
      %p1002 = scmp.le.s32.totalorder 2, %s12
      // Predicated region
      $region37: #{tpu_custom_call.1} parent=5 // pred_check
        %p1003 = pneg %p1002
      $region38: #{tpu_custom_call.1} parent=5 // pred_check_branch
        %1005 = sbr.rel (%p1003) target = $region40
      $region39: #{tpu_custom_call.1} parent=5 // pred_region
        %s1006 = ssub.s32 %s12, 2
        // Predicated region
        $region41: #{tpu_custom_call.1} parent=39 // pred_check
          %p1007 = pneg %p109
        $region42: #{tpu_custom_call.1} parent=39 // pred_check_branch
          %1009 = sbr.rel (%p1007) target = $region44
        $region43: #{tpu_custom_call.1} parent=39 // pred_region
          %s1010 = sand.u32 %s94, 1
          %s1011 = scalar_lea.sflag [#allocation3], %s1010
          %s1012 = sand.u32 %s94, 1
          %s1013 = smul.addr %s1012, 16
          %s1014 = scalar_lea.vmem [#allocation2], %s1013
          %1015 = dma.done %s1011, 256
        $region44: #{tpu_custom_call.1} parent=39 // pred_fallthru
          _
      $region40: #{tpu_custom_call.1} parent=5 // pred_fallthru
        _
    $region6: #{tpu_custom_call.1} parent=1 // loop_footer
      %s16 = sadd.s32 1, %s12
    $region7: #{tpu_custom_call.1} parent=1 // loop_footer_branch
      %11 = sbr.rel target = $region3
    $region8: #{tpu_custom_call.1} parent=1 // loop_exit
      _
    %1016 = vsyncpa [#allocation3], 1
    %s1017 = scalar_lea.sflag [#allocation3], 1
    %1018 = vsyncpa %s1017, 1

</llo_original>
